<compile_context>
chip_gen: v5e
topology: v5e:2x2
jax: 0.10.0
libtpu: 0.0.40
codegen_flags: <defaults>
</compile_context>

<pallas_src>
import functools

import jax
import jax.numpy as jnp
from jax.experimental import pallas as pl
from jax.experimental.pallas import tpu as pltpu


def _kd_loss_kernel(s_ref, t_ref, o_ref, *, inv_t, n_rows, tm):
    # (TM, C) tiles; softmax math in f32 regardless of the input dtype.
    s = s_ref[...].astype(jnp.float32)
    t = t_ref[...].astype(jnp.float32)

    # student log-softmax(out_s / T) pieces (max-shifted for stability):
    #   log_p_s = s_shift - log(sum_s)
    s_shift = (s - jnp.max(s, axis=1, keepdims=True)) * inv_t
    log_sum_s = jnp.log(jnp.sum(jnp.exp(s_shift), axis=1, keepdims=True))

    # teacher softmax(out_t / T) pieces, kept unnormalized:
    t_shift = (t - jnp.max(t, axis=1, keepdims=True)) * inv_t
    t_exp = jnp.exp(t_shift)
    sum_t = jnp.sum(t_exp, axis=1, keepdims=True)

    # fused per-row KL:
    #   sum_c p_t*(log p_t - log p_s)
    # = sum_c t_exp*(t_shift - s_shift)/sum_t - log(sum_t) + log(sum_s)
    num = jnp.sum(t_exp * (t_shift - s_shift), axis=1, keepdims=True)
    kl_row = num / sum_t - jnp.log(sum_t) + log_sum_s            # (TM, 1)

    # zero out rows past the true batch size (ragged last tile). jnp.where is a
    # select, so garbage/NaN in OOB-padded rows cannot leak into the sum.
    row0 = pl.program_id(0) * tm
    rows = row0 + jax.lax.broadcasted_iota(jnp.int32, (tm, 1), 0)
    kl_row = jnp.where(rows < n_rows, kl_row, 0.0)

    # per-tile partial: sublane-reduce the rows (XLU) and store the scalar
    # broadcast into one (8,128) tile -> output HBM traffic is 4 KiB per step
    # instead of TM*512 B.
    kl_tile = jnp.sum(kl_row, keepdims=True)                     # (1, 1)
    o_ref[...] = jnp.broadcast_to(kl_tile, (8, 128))


def kd_loss(out_s, out_t, T, *, block_rows=None, cast_inputs_to_bf16=False):
    """KD loss. out_s, out_t: (N, C) logits (f32 or bf16). Returns scalar f32."""
    assert out_s.shape == out_t.shape and out_s.ndim == 2
    assert T > 0, "KDLoss temperature must be positive"

    if cast_inputs_to_bf16:
        # Optional: halves input HBM bytes on a bandwidth-bound kernel; in-kernel
        # math stays f32. Off by default so f32 callers keep exact numerics.
        out_s = out_s.astype(jnp.bfloat16)
        out_t = out_t.astype(jnp.bfloat16)

    n, c = out_s.shape
    itemsize = max(jnp.dtype(out_s.dtype).itemsize, jnp.dtype(out_t.dtype).itemsize)

    # TODO(synk): for vocab-scale C (>=32k) also tile the class axis with an
    # online/streaming logsumexp (flash-softmax style); this version keeps the
    # full class axis per tile, which covers classifier-sized C on all gens.

    # Per-row VMEM footprint: 2 inputs x 2 pipeline buffers x C x itemsize for
    # the auto-pipelined inputs, plus ~5 live f32 (TM, C) intermediates inside
    # the kernel body (s, t, s_shift/t_shift, t_exp, product).
    per_row_bytes = 4 * c * itemsize + 5 * 4 * c

    if block_rows is None:
        # ~24 MiB working-set budget: safe under v7x's 64 MiB physical VMEM and
        # tiny relative to the 128 MiB on v5e/v6e.
        budget = 24 * 1024 * 1024
        tm = budget // max(per_row_bytes, 1)
        tm = int(max(8, min(1024, (tm // 8) * 8)))
        # Guarantee >= 2 grid tiles when the batch allows it so both v7x
        # TensorCores get work ("parallel" axis). Costs one extra ~0.35us grid
        # step on single-TC v5e/v6e.
        if n >= 16:
            half = (((n + 1) // 2) + 7) // 8 * 8
            tm = min(tm, half)
    else:
        tm = int(block_rows)

    if tm >= n:
        tm = n                        # single tile covering the whole batch
    else:
        tm = max(8, (tm // 8) * 8)    # tiled: sublane dim must be a multiple of 8

    num_tiles = pl.cdiv(n, tm)

    # VMEM limit derived from the actual working set (+ headroom), instead of a
    # fixed 48 MiB; clamped to stay well within every generation's VMEM.
    working_set = tm * per_row_bytes
    vmem_limit = int(min(48 * 1024 * 1024,
                         max(16 * 1024 * 1024, working_set + (8 << 20))))

    kernel = functools.partial(
        _kd_loss_kernel, inv_t=1.0 / float(T), n_rows=n, tm=tm)

    per_tile = pl.pallas_call(
        kernel,
        grid=(num_tiles,),
        out_shape=jax.ShapeDtypeStruct((num_tiles * 8, 128), jnp.float32),
        in_specs=[
            pl.BlockSpec((tm, c), lambda i: (i, 0)),
            pl.BlockSpec((tm, c), lambda i: (i, 0)),
        ],
        out_specs=pl.BlockSpec((8, 128), lambda i: (i, 0)),
        compiler_params=pltpu.CompilerParams(
            dimension_semantics=("parallel",),
            vmem_limit_bytes=vmem_limit,
        ),
    )(out_s, out_t)

    # tiny epilogue: sum the per-tile partials, 'batchmean' + T^2 scaling.
    partials = per_tile.reshape(num_tiles, 8, 128)[:, 0, 0]
    return jnp.sum(partials) * (float(T) * float(T) / n)


def _kd_loss_ref(out_s, out_t, T):
    s = out_s.astype(jnp.float32) / T
    t = out_t.astype(jnp.float32) / T
    log_p_s = jax.nn.log_softmax(s, axis=1)
    p_t = jax.nn.softmax(t, axis=1)
    log_p_t = jax.nn.log_softmax(t, axis=1)
    return jnp.sum(p_t * (log_p_t - log_p_s)) * T * T / out_s.shape[0]


if __name__ == "__main__":
    key = jax.random.PRNGKey(0)
    k1, k2, k3, k4 = jax.random.split(key, 4)
    T = 4.0               # distillation temperature

    # Small check: batch=8 rows of 32-class logits, single tile.
    N, C = 8, 32
    out_s = jax.random.normal(k1, (N, C), dtype=jnp.float32)
    out_t = jax.random.normal(k2, (N, C), dtype=jnp.float32)
    loss = kd_loss(out_s, out_t, T)
    jax.block_until_ready(loss)
    ref = _kd_loss_ref(out_s, out_t, T)
    assert jnp.isfinite(loss) and loss >= 0.0          # KL >= 0
    assert jnp.abs(loss - ref) < 1e-5, (float(loss), float(ref))

    # Tiled check: batch=40, 96 classes, forced TM=16 -> 3 tiles with a ragged
    # last tile (exercises masking + per-tile partial reduction).
    N2, C2 = 40, 96
    out_s2 = jax.random.normal(k3, (N2, C2), dtype=jnp.float32)
    out_t2 = jax.random.normal(k4, (N2, C2), dtype=jnp.float32)
    loss2 = kd_loss(out_s2, out_t2, T, block_rows=16)
    jax.block_until_ready(loss2)
    ref2 = _kd_loss_ref(out_s2, out_t2, T)
    assert jnp.isfinite(loss2) and loss2 >= 0.0
    assert jnp.abs(loss2 - ref2) < 1e-4 * max(1.0, abs(float(ref2))), (
        float(loss2), float(ref2))

    print("KERNEL_OK")
</pallas_src>

<mosaic_0001>
module attributes {stable_mosaic.version = 11 : i64} {
  func.func @_kd_loss_kernel(%arg0: i32, %arg1: memref<8x32xf32, #tpu.memory_space<vmem>>, %arg2: memref<8x32xf32, #tpu.memory_space<vmem>>, %arg3: memref<8x128xf32, #tpu.memory_space<vmem>>) attributes {dimension_semantics = [#tpu.dimension_semantics<parallel>], iteration_bounds = array<i64: 1>, scalar_prefetch = 0 : i64, scratch_operands = 0 : i64, tpu.core_type = #tpu.core_type<tc>, window_params = [{transform_indices = @transform_0, window_bounds = array<i64: 8, 32>}, {transform_indices = @transform_1, window_bounds = array<i64: 8, 32>}, {transform_indices = @transform_2, window_bounds = array<i64: 8, 128>}]} {
    %c0 = arith.constant 0 : index
    %c0_0 = arith.constant 0 : index
    %0 = vector.load %arg1[%c0, %c0_0] : memref<8x32xf32, #tpu.memory_space<vmem>>, vector<8x32xf32>
    %c0_1 = arith.constant 0 : index
    %c0_2 = arith.constant 0 : index
    %1 = vector.load %arg2[%c0_1, %c0_2] : memref<8x32xf32, #tpu.memory_space<vmem>>, vector<8x32xf32>
    %cst = arith.constant dense<0xFF800000> : vector<8xf32>
    %2 = vector.multi_reduction <maximumf>, %0, %cst [1] : vector<8x32xf32> to vector<8xf32>
    %3 = vector.shape_cast %2 : vector<8xf32> to vector<8x1xf32>
    %4 = vector.broadcast %3 : vector<8x1xf32> to vector<8x32xf32>
    %5 = arith.subf %0, %4 : vector<8x32xf32>
    %cst_3 = arith.constant 2.500000e-01 : f32
    %6 = vector.broadcast %cst_3 : f32 to vector<8x32xf32>
    %7 = arith.mulf %5, %6 : vector<8x32xf32>
    %8 = math.exp %7 : vector<8x32xf32>
    %cst_4 = arith.constant dense<0.000000e+00> : vector<8xf32>
    %9 = vector.multi_reduction <add>, %8, %cst_4 [1] : vector<8x32xf32> to vector<8xf32>
    %10 = vector.shape_cast %9 : vector<8xf32> to vector<8x1xf32>
    %11 = math.log %10 : vector<8x1xf32>
    %cst_5 = arith.constant dense<0xFF800000> : vector<8xf32>
    %12 = vector.multi_reduction <maximumf>, %1, %cst_5 [1] : vector<8x32xf32> to vector<8xf32>
    %13 = vector.shape_cast %12 : vector<8xf32> to vector<8x1xf32>
    %14 = vector.broadcast %13 : vector<8x1xf32> to vector<8x32xf32>
    %15 = arith.subf %1, %14 : vector<8x32xf32>
    %cst_6 = arith.constant 2.500000e-01 : f32
    %16 = vector.broadcast %cst_6 : f32 to vector<8x32xf32>
    %17 = arith.mulf %15, %16 : vector<8x32xf32>
    %18 = math.exp %17 : vector<8x32xf32>
    %cst_7 = arith.constant dense<0.000000e+00> : vector<8xf32>
    %19 = vector.multi_reduction <add>, %18, %cst_7 [1] : vector<8x32xf32> to vector<8xf32>
    %20 = vector.shape_cast %19 : vector<8xf32> to vector<8x1xf32>
    %21 = arith.subf %17, %7 : vector<8x32xf32>
    %22 = arith.mulf %18, %21 : vector<8x32xf32>
    %cst_8 = arith.constant dense<0.000000e+00> : vector<8xf32>
    %23 = vector.multi_reduction <add>, %22, %cst_8 [1] : vector<8x32xf32> to vector<8xf32>
    %24 = vector.shape_cast %23 : vector<8xf32> to vector<8x1xf32>
    %25 = arith.divf %24, %20 : vector<8x1xf32>
    %26 = math.log %20 : vector<8x1xf32>
    %27 = arith.subf %25, %26 : vector<8x1xf32>
    %28 = arith.addf %27, %11 : vector<8x1xf32>
    %c8_i32 = arith.constant 8 : i32
    %29 = arith.muli %arg0, %c8_i32 : i32
    %30 = tpu.iota {dimensions = array<i32: 0>} : vector<8x1xi32>
    %31 = vector.broadcast %29 : i32 to vector<8x1xi32>
    %32 = arith.addi %31, %30 : vector<8x1xi32>
    %c8_i32_9 = arith.constant 8 : i32
    %33 = vector.broadcast %c8_i32_9 : i32 to vector<8x1xi32>
    %34 = arith.cmpi slt, %32, %33 : vector<8x1xi32>
    %cst_10 = arith.constant 0.000000e+00 : f32
    %35 = vector.broadcast %cst_10 : f32 to vector<8x1xf32>
    %36 = arith.select %34, %28, %35 : vector<8x1xi1>, vector<8x1xf32>
    %37 = vector.shape_cast %36 : vector<8x1xf32> to vector<1x8x1xf32>
    %cst_11 = arith.constant dense<0.000000e+00> : vector<1xf32>
    %38 = vector.multi_reduction <add>, %37, %cst_11 [1, 2] : vector<1x8x1xf32> to vector<1xf32>
    %39 = vector.shape_cast %38 : vector<1xf32> to vector<1x1x1xf32>
    %40 = vector.extract %39[0, 0, 0] : f32 from vector<1x1x1xf32>
    %41 = vector.broadcast %40 : f32 to vector<1x1xf32>
    %42 = vector.shape_cast %41 : vector<1x1xf32> to vector<1x1xf32>
    %43 = vector.broadcast %42 : vector<1x1xf32> to vector<8x128xf32>
    %c0_12 = arith.constant 0 : index
    %c0_13 = arith.constant 0 : index
    %44 = vector.load %arg3[%c0_12, %c0_13] : memref<8x128xf32, #tpu.memory_space<vmem>>, vector<8x128xf32>
    tpu.vector_store %arg3[%c0_12, %c0_13], %43 {strides = array<i32>} : memref<8x128xf32, #tpu.memory_space<vmem>>, vector<8x128xf32>,
    return
  }
  func.func @transform_0(%arg0: i32) -> (i32, i32) {
    %c0_i32 = arith.constant 0 : i32
    %c0_i32_0 = arith.constant 0 : i32
    return %arg0, %c0_i32 : i32, i32
  }
  func.func @transform_1(%arg0: i32) -> (i32, i32) {
    %c0_i32 = arith.constant 0 : i32
    %c0_i32_0 = arith.constant 0 : i32
    return %arg0, %c0_i32 : i32, i32
  }
  func.func @transform_2(%arg0: i32) -> (i32, i32) {
    %c0_i32 = arith.constant 0 : i32
    %c0_i32_0 = arith.constant 0 : i32
    return %arg0, %c0_i32 : i32, i32
  }
}

</mosaic_0001>

<llo_original>
// kernel: tpu_custom_call.1
$region0: #{tpu_custom_call.1}
  #allocation0 [shape = 'u32[]', space=smem, size = 0x4, offset = 0x4, fixed_abs, tag = 'smem constant byte address 0x4 - core index']
  #allocation1 [shape = 'u32[72,128]{1,0:T(1,128)}', space=vmem, size = 0x9000, scoped, tag = 'internal scratch']
  %s0 = inlined_call_operand.hbm [shape: f32[8,32], index: 0, kind: input, shape index: {}]
  %s1 = inlined_call_operand.hbm [shape: f32[8,32], index: 1, kind: input, shape index: {}]
  %s2 = inlined_call_operand.hbm [shape: f32[8,128], index: 2, kind: output, shape index: {}]
  %s3 = sld [smem:[#allocation0]]
  $region26: #{tpu_custom_call.1} parent=0
    _
  %s5 = ssub.s32 1, %s3
  %s6 = scalar_select 0, %s5, %s3
  $region1: #{tpu_custom_call.1} parent=0
    #allocation2 [shape = 'u8[4096]{0}', space=vmem, size = 0x1000, scoped, tag = 'input window, operand 0, single buffered']
    #allocation3 [shape = 's32[1]{0}', space=sflag, size = 0x4, scoped, tag = 'scoped memory for tpu_custom_call.1']
    #allocation4 [shape = 's32[1]{0}', space=sflag, size = 0x4, scoped, tag = 'scoped memory for tpu_custom_call.1']
    #allocation5 [shape = 'u8[4096]{0}', space=vmem, size = 0x1000, scoped, tag = 'input window, operand 1, single buffered']
    #allocation6 [shape = 's32[1]{0}', space=sflag, size = 0x4, scoped, tag = 'scoped memory for tpu_custom_call.1']
    #allocation7 [shape = 'u8[4096]{0}', space=vmem, size = 0x1000, scoped, tag = 'output window, operand 0, single buffered']
    %7 = vsyncpa [#allocation3], 0
    %8 = vsyncpa [#allocation6], 0
    %9 = vsyncpa [#allocation4], 0
    // Predicated region
    $region2: #{tpu_custom_call.1} parent=1 // pred_check
      _
    $region3: #{tpu_custom_call.1} parent=1 // pred_check_branch
      %11 = sbr.rel (0) target = $region5
    $region4: #{tpu_custom_call.1} parent=1 // pred_region
      %13 = vsyncadd [#allocation3], 0
      %s15 = sshll.u32 %s0, 4
      %s16 = int_to_ptr.hbm [resolvable:$true] %s15
      %s17 = sshll.u32 [#allocation2], 4
      %s18 = int_to_ptr.vmem [resolvable:$true] %s17
      %20 = dma.hbm_to_vmem [thread:$0]  %s16, 128, %s18, [#allocation3]
    $region5: #{tpu_custom_call.1} parent=1 // pred_fallthru
      _
    // Predicated region
    $region6: #{tpu_custom_call.1} parent=1 // pred_check
      _
    $region7: #{tpu_custom_call.1} parent=1 // pred_check_branch
      %22 = sbr.rel (0) target = $region9
    $region8: #{tpu_custom_call.1} parent=1 // pred_region
      %24 = vsyncadd [#allocation6], 0
      %s26 = sshll.u32 %s1, 4
      %s27 = int_to_ptr.hbm [resolvable:$true] %s26
      %s28 = sshll.u32 [#allocation5], 4
      %s29 = int_to_ptr.vmem [resolvable:$true] %s28
      %31 = dma.hbm_to_vmem [thread:$0]  %s27, 128, %s29, [#allocation6]
    $region9: #{tpu_custom_call.1} parent=1 // pred_fallthru
      _
    // Predicated region
    $region10: #{tpu_custom_call.1} parent=1 // pred_check
      _
    $region11: #{tpu_custom_call.1} parent=1 // pred_check_branch
      %33 = sbr.rel (0) target = $region13
    $region12: #{tpu_custom_call.1} parent=1 // pred_region
      %35 = dma.done [#allocation3], 128
    $region13: #{tpu_custom_call.1} parent=1 // pred_fallthru
      _
    // Predicated region
    $region14: #{tpu_custom_call.1} parent=1 // pred_check
      _
    $region15: #{tpu_custom_call.1} parent=1 // pred_check_branch
      %37 = sbr.rel (0) target = $region17
    $region16: #{tpu_custom_call.1} parent=1 // pred_region
      %39 = dma.done [#allocation6], 128
    $region17: #{tpu_custom_call.1} parent=1 // pred_fallthru
      _
    %v40 = vld [vmem:[#allocation2] sm:$0xff]
    %v41 = vld [vmem:[#allocation5] sm:$0xff]
    %vm42 = vcmask 261120
    %v43 = vsel %vm42, %v40, -inf
    %44 = vmax.xlane.f32.xlu0 %v43
    %v45 = vpop.xlane.xlu0 %44
    %v46 = vsub.f32 %v40, %v45
    %v47 = vmul.f32 %v46, 0.25
    %v48 = vmul.f32 %v47, 1.442695
    %v49 = vpow.pop %v48
    %v50 = vsel %vm42, %v49, 0.0
    %51 = vadd.xlane.f32.xlu0 %v50
    %v52 = vpop.xlane.xlu0 %51
    %v53 = vlog2.pop %v52
    %v54 = vmul.f32 %v53, 0.6931472
    %v55 = vsel %vm42, %v41, -inf
    %56 = vmax.xlane.f32.xlu0 %v55
    %v57 = vpop.xlane.xlu0 %56
    %v58 = vsub.f32 %v41, %v57
    %v59 = vmul.f32 %v58, 0.25
    %v60 = vmul.f32 %v59, 1.442695
    %v61 = vpow.pop %v60
    %v62 = vsel %vm42, %v61, 0.0
    %63 = vadd.xlane.f32.xlu0 %v62
    %v64 = vpop.xlane.xlu0 %63
    %v65 = vsub.f32 %v59, %v47
    %v66 = vmul.f32 %v61, %v65
    %v67 = vsel %vm42, %v66, 0.0
    %68 = vadd.xlane.f32.xlu0 %v67
    %v69 = vpop.xlane.xlu0 %68
    %v70 = vrcp.pop %v64
    %v71 = vmul.f32 %v64, %v70
    %v72 = vsub.f32 1.0, %v71
    %v73 = vmul.f32 %v70, %v72
    %v74 = vadd.f32 %v70, %v73
    %vm75 = vweird.f32 %v64
    %vm76 = vweird.f32 %v70
    %vm77 = vmor %vm75, %vm76
    %v78 = vsel %vm77, %v70, %v74
    %v79 = vand.u32 2147483647, %v64
    %vm80 = vcmp.eq.f32.partialorder %v79, 8.507059e+37
    %v81 = vand.u32 %v64, 2147483648
    %v82 = vor.u32 1.1754944e-38, %v81
    %v83 = vsel %vm80, %v82, %v78
    %v84 = vmul.f32 %v69, %v83
    %v85 = vlog2.pop %v64
    %v86 = vmul.f32 %v85, 0.6931472
    %v87 = vsub.f32 %v84, %v86
    %v88 = vadd.f32 %v87, %v54
    %s89 = smul.u32 0, 8
    %v90 = vlaneseq
    %v91 = vshrl.u32 %v90, 7
    %v92 = vstv %s89
    %v93 = vadd.s32 %v92, %v91
    %vm94 = vcmp.lt.s32.totalorder %v93, 8
    %v95 = vsel %vm94, %v88, 0.0
    %vm96 = vcmask 7168
    %v97 = vsel %vm96, %v95, 0.0
    %98 = vadd.xlane.f32.xlu0 %v97
    %v99 = vpop.xlane.xlu0 %98
    %v100 = vrot.slane %v99, 4
    %v101 = vadd.f32 %v99, %v100
    %v102 = vrot.slane %v101, 2
    %v103 = vadd.f32 %v101, %v102
    %v104 = vrot.slane %v103, 1
    %v105 = vadd.f32 %v103, %v104
    %s106 = vtos %v105
    %v107 = vstv %s106
    %108 = vst [vmem:[#allocation7] sm:$0xff] %v107
    // Predicated region
    $region18: #{tpu_custom_call.1} parent=1 // pred_check
      _
    $region19: #{tpu_custom_call.1} parent=1 // pred_check_branch
      %110 = sbr.rel (0) target = $region21
    $region20: #{tpu_custom_call.1} parent=1 // pred_region
      %112 = vsyncadd [#allocation4], 0
      %s114 = sshll.u32 [#allocation7], 4
      %s115 = int_to_ptr.vmem [resolvable:$true] %s114
      %s116 = sshll.u32 %s2, 4
      %s117 = int_to_ptr.hbm [resolvable:$true] %s116
      %119 = dma.vmem_to_hbm [thread:$0]  %s115, 128, %s117, [#allocation4]
    $region21: #{tpu_custom_call.1} parent=1 // pred_fallthru
      _
    // Predicated region
    $region22: #{tpu_custom_call.1} parent=1 // pred_check
      _
    $region23: #{tpu_custom_call.1} parent=1 // pred_check_branch
      %121 = sbr.rel (0) target = $region25
    $region24: #{tpu_custom_call.1} parent=1 // pred_region
      %123 = dma.done [#allocation4], 128
    $region25: #{tpu_custom_call.1} parent=1 // pred_fallthru
      _
    %124 = vsyncpa [#allocation3], 1
    %125 = vsyncpa [#allocation6], 1
    %126 = vsyncpa [#allocation4], 1

</llo_original>
